<compile_context>
chip_gen: v5e
topology: v5e:2x2
jax: 0.10.0
libtpu: 0.0.40
codegen_flags: <defaults>
</compile_context>

<pallas_src>
import functools
import math

import jax
import jax.numpy as jnp
from jax.experimental import pallas as pl
from jax.experimental.pallas import tpu as pltpu


def _mha_ffn_ln(x_q, q, k, v, wo_ref, w1_ref, b1_ref, w2_ref, vecs_ref, o_ref,
                *, num_heads, d_key, eps):
    """Shared tail: MHA (Q pre-scaled), residual+LN1, FFN, residual+LN2."""
    H, dk = num_heads, d_key
    D = H * dk
    TQ = q.shape[0]
    S = k.shape[0]

    # Packed per-channel vectors, rows: bo, g1, be1, b2, g2, be2.
    bo = vecs_ref[0:1, :]
    g1 = vecs_ref[1:2, :]
    be1 = vecs_ref[2:3, :]
    b2 = vecs_ref[3:4, :]
    g2 = vecs_ref[4:5, :]
    be2 = vecs_ref[5:6, :]

    # ---- head split ----
    # Lane-preserving reshape+swapaxes when dk fills whole 128-lane vregs
    # (realistic configs, no XLU lane shuffles); otherwise fall back to
    # explicit per-head lane slices (tiny dk such as the dk=16 test config).
    if dk % 128 == 0:
        qh = q.reshape(TQ, H, dk).swapaxes(0, 1).astype(jnp.bfloat16)
        kh = k.reshape(S, H, dk).swapaxes(0, 1).astype(jnp.bfloat16)
        vh = v.reshape(S, H, dk).swapaxes(0, 1).astype(jnp.bfloat16)
    else:
        qh = jnp.stack([q[:, h * dk:(h + 1) * dk] for h in range(H)],
                       axis=0).astype(jnp.bfloat16)          # (H, TQ, dk)
        kh = jnp.stack([k[:, h * dk:(h + 1) * dk] for h in range(H)],
                       axis=0).astype(jnp.bfloat16)          # (H, S, dk)
        vh = jnp.stack([v[:, h * dk:(h + 1) * dk] for h in range(H)],
                       axis=0).astype(jnp.bfloat16)          # (H, S, dk)

    # ---- attention (1/sqrt(dk) already folded into the Q projection) ----
    s = jnp.einsum("hqd,hkd->hqk", qh, kh,
                   preferred_element_type=jnp.float32)       # (H, TQ, S) f32
    s = s - jnp.max(s, axis=-1, keepdims=True)
    p = jnp.exp(s)
    # approx reciprocal runs on the EUP slot (~free); ~1e-3 relative error.
    p = p * pl.reciprocal(jnp.sum(p, axis=-1, keepdims=True), approx=True)

    ctx = jnp.einsum("hqk,hkd->hqd", p.astype(jnp.bfloat16), vh,
                     preferred_element_type=jnp.float32)     # (H, TQ, dk)
    if dk % 128 == 0:
        ctx2d = ctx.swapaxes(0, 1).reshape(TQ, D)
    else:
        ctx2d = jnp.concatenate([ctx[h] for h in range(H)], axis=-1)

    attn = (jnp.dot(ctx2d.astype(jnp.bfloat16), wo_ref[...],
                    preferred_element_type=jnp.float32) + bo)

    # ---- residual + LayerNorm1 (f32) ----
    r1 = x_q + attn
    mu1 = jnp.mean(r1, axis=-1, keepdims=True)
    c1 = r1 - mu1
    var1 = jnp.mean(c1 * c1, axis=-1, keepdims=True)
    y1 = c1 * jax.lax.rsqrt(var1 + eps) * g1 + be1

    # ---- position-wise feed-forward (bf16 MXU, f32 accumulate) ----
    h1 = (jnp.dot(y1.astype(jnp.bfloat16), w1_ref[...],
                  preferred_element_type=jnp.float32) + b1_ref[...])
    h1 = jnp.maximum(h1, 0.0)
    ffn = (jnp.dot(h1.astype(jnp.bfloat16), w2_ref[...],
                   preferred_element_type=jnp.float32) + b2)

    # ---- residual + LayerNorm2 (f32) ----
    r2 = y1 + ffn
    mu2 = jnp.mean(r2, axis=-1, keepdims=True)
    c2 = r2 - mu2
    var2 = jnp.mean(c2 * c2, axis=-1, keepdims=True)
    y2 = c2 * jax.lax.rsqrt(var2 + eps) * g2 + be2

    # TODO(synk): emit bf16 here if downstream accepts it (halves writeback);
    # kept f32 for parity with the reference.
    o_ref[0] = y2.astype(o_ref.dtype)


def encoder_layer_kernel_full(x_ref, wqkv_ref, bqkv_ref, wo_ref, w1_ref, b1_ref,
                              w2_ref, vecs_ref, o_ref, *, num_heads, d_key, eps):
    """tile_q == S: single x stream, one fused (D, 3D) QKV MXU matmul."""
    D = num_heads * d_key
    x = x_ref[0]                                             # (S, D) f32
    qkv = (jnp.dot(x.astype(jnp.bfloat16), wqkv_ref[...],
                   preferred_element_type=jnp.float32) + bqkv_ref[...])
    q = qkv[:, :D]                    # scale already folded into Wq / bq
    k = qkv[:, D:2 * D]
    v = qkv[:, 2 * D:]
    _mha_ffn_ln(x, q, k, v, wo_ref, w1_ref, b1_ref, w2_ref, vecs_ref, o_ref,
                num_heads=num_heads, d_key=d_key, eps=eps)


def encoder_layer_kernel_tiled(xq_ref, xkv_ref, wqkv_ref, bqkv_ref, wo_ref,
                               w1_ref, b1_ref, w2_ref, vecs_ref, o_ref, kv_ref,
                               *, num_heads, d_key, eps):
    """tile_q < S: K/V projected once per batch element (qi == 0) into a bf16
    VMEM scratch and reused by every query tile; query stream stays f32 for
    the residual, the full-sequence K/V source arrives as bf16."""
    D = num_heads * d_key
    qi = pl.program_id(1)

    w = wqkv_ref[...]                                        # (D, 3D) bf16
    bqkv = bqkv_ref[...]                                     # (1, 3D) f32

    @pl.when(qi == 0)
    def _():
        kv = (jnp.dot(xkv_ref[0], w[:, D:],
                      preferred_element_type=jnp.float32) + bqkv[:, D:])
        kv_ref[...] = kv.astype(jnp.bfloat16)                # (S, 2D) cache

    x_q = xq_ref[0]                                          # (TQ, D) f32
    q = (jnp.dot(x_q.astype(jnp.bfloat16), w[:, :D],
                 preferred_element_type=jnp.float32) + bqkv[:, :D])
    k = kv_ref[:, :D]                                        # (S, D) bf16
    v = kv_ref[:, D:]                                        # (S, D) bf16
    _mha_ffn_ln(x_q, q, k, v, wo_ref, w1_ref, b1_ref, w2_ref, vecs_ref, o_ref,
                num_heads=num_heads, d_key=d_key, eps=eps)


def encoder_layer(x, params, *, num_heads, d_key, eps=1e-5, tile_q=None):
    B, S, D = x.shape
    assert D == num_heads * d_key
    d_ff = params["w1"].shape[1]

    # Default query tile: full sequence for short S; otherwise a multiple of
    # 256 (fills the v6e/v7x 256x256 MXU M dimension; 128 suffices on v5e).
    if tile_q is None:
        if S <= 512:
            tile_q = S
        elif S % 512 == 0:
            tile_q = 512
        elif S % 256 == 0:
            tile_q = 256
        else:
            tile_q = S
    tile_q = min(tile_q, S)
    assert S % tile_q == 0 and tile_q % 8 == 0
    n_qt = S // tile_q
    tiled = n_qt > 1

    # ---- host-side parameter packing (one-time) ----
    # 1/sqrt(dk) attention scale folded into the Q projection columns.
    q_scale = 1.0 / math.sqrt(d_key)
    wqkv = jnp.concatenate([params["wq"] * q_scale, params["wk"], params["wv"]],
                           axis=1).astype(jnp.bfloat16)              # (D, 3D)
    bqkv = jnp.concatenate([params["bq"] * q_scale, params["bk"], params["bv"]],
                           axis=1).astype(jnp.float32)               # (1, 3D)
    wo = params["wo"].astype(jnp.bfloat16)
    w1 = params["w1"].astype(jnp.bfloat16)
    w2 = params["w2"].astype(jnp.bfloat16)
    b1 = params["b1"].astype(jnp.float32)
    vecs = jnp.concatenate([params["bo"], params["g1"], params["be1"],
                            params["b2"], params["g2"], params["be2"]],
                           axis=0).astype(jnp.float32)               # (6, D)

    weight_args = (wqkv, bqkv, wo, w1, b1, w2, vecs)
    # Grid-invariant weights: whole-array VMEM residency (fetched once, not
    # pipelined, no double-buffering).
    weight_specs = [pl.BlockSpec(memory_space=pltpu.MemorySpace.VMEM)
                    for _ in weight_args]

    def nbytes(a):
        return a.size * a.dtype.itemsize
    weight_bytes = sum(nbytes(a) for a in weight_args)

    if not tiled:
        kernel = functools.partial(encoder_layer_kernel_full,
                                   num_heads=num_heads, d_key=d_key, eps=eps)
        grid = (B,)
        in_specs = [pl.BlockSpec((1, S, D), lambda b: (b, 0, 0))] + weight_specs
        out_specs = pl.BlockSpec((1, S, D), lambda b: (b, 0, 0))
        scratch_shapes = []
        operands = (x,) + weight_args
        dim_sem = ("parallel",)
        act_bytes = 2 * S * D * 4 + 2 * S * D * 4       # x + out, double-buffered
        scratch_bytes = 0
        kv_stream_bytes = 0
    else:
        x_kv = x.astype(jnp.bfloat16)                   # bf16 K/V source stream
        kernel = functools.partial(encoder_layer_kernel_tiled,
                                   num_heads=num_heads, d_key=d_key, eps=eps)
        grid = (B, n_qt)
        in_specs = [pl.BlockSpec((1, tile_q, D), lambda b, qi: (b, qi, 0)),
                    pl.BlockSpec((1, S, D), lambda b, qi: (b, 0, 0))] + weight_specs
        out_specs = pl.BlockSpec((1, tile_q, D), lambda b, qi: (b, qi, 0))
        scratch_shapes = [pltpu.VMEM((S, 2 * D), jnp.bfloat16)]   # cached K/V
        operands = (x, x_kv) + weight_args
        # qi carries the K/V scratch -> "arbitrary"; B still shards across TCs.
        dim_sem = ("parallel", "arbitrary")
        act_bytes = (2 * tile_q * D * 4 +               # f32 query tiles
                     2 * S * D * 2 +                    # bf16 K/V source
                     2 * tile_q * D * 4)                # output tiles
        scratch_bytes = S * 2 * D * 2
        kv_stream_bytes = B * S * D * 2

    # ---- VMEM budget: single-buffered weights + double-buffered activations
    # + in-kernel intermediates, capped at ~88% of physical VMEM ----
    interm_bytes = (2 * num_heads * tile_q * S * 4      # scores + probs (f32)
                    + tile_q * 3 * D * 4                # fused QKV activations
                    + 2 * tile_q * d_ff * 4)            # FFN hidden
    need = weight_bytes + act_bytes + scratch_bytes + interm_bytes + (8 << 20)
    try:
        cap = int(0.88 * pltpu.get_tpu_info().vmem_capacity_bytes)
    except Exception:
        cap = 48 * 1024 * 1024
    vmem_limit = int(max(32 << 20, min(cap, need)))

    # ---- advisory cost estimate (weights counted once; K/V proj once/batch) ----
    flops = B * (8 * S * D * D + 4 * S * S * D + 4 * S * D * d_ff)
    transcendentals = B * (num_heads * S * S + num_heads * S + 2 * S)
    bytes_accessed = (B * S * D * 4          # f32 query / residual stream
                      + kv_stream_bytes      # bf16 K/V source (tiled path only)
                      + B * S * D * 4        # output
                      + weight_bytes)        # weights fetched once

    return pl.pallas_call(
        kernel,
        out_shape=jax.ShapeDtypeStruct((B, S, D), jnp.float32),
        grid_spec=pltpu.PrefetchScalarGridSpec(
            num_scalar_prefetch=0,
            grid=grid,
            in_specs=in_specs,
            out_specs=out_specs,
            scratch_shapes=scratch_shapes,
        ),
        compiler_params=pltpu.CompilerParams(
            dimension_semantics=dim_sem,
            vmem_limit_bytes=vmem_limit,
        ),
        cost_estimate=pl.CostEstimate(
            flops=int(flops),
            transcendentals=int(transcendentals),
            bytes_accessed=int(bytes_accessed),
        ),
    )(*operands)


def encoder_layer_ref(x, params, *, num_heads, d_key, eps=1e-5):
    """Pure-JAX f32 reference for correctness checking."""
    B, S, D = x.shape

    def ln(z, g, b):
        mu = jnp.mean(z, axis=-1, keepdims=True)
        var = jnp.mean((z - mu) ** 2, axis=-1, keepdims=True)
        return (z - mu) * jax.lax.rsqrt(var + eps) * g + b

    q = x @ params["wq"] + params["bq"]
    k = x @ params["wk"] + params["bk"]
    v = x @ params["wv"] + params["bv"]
    qh = q.reshape(B, S, num_heads, d_key).transpose(0, 2, 1, 3)
    kh = k.reshape(B, S, num_heads, d_key).transpose(0, 2, 1, 3)
    vh = v.reshape(B, S, num_heads, d_key).transpose(0, 2, 1, 3)
    s = jnp.einsum("bhqd,bhkd->bhqk", qh, kh) / math.sqrt(d_key)
    p = jax.nn.softmax(s, axis=-1)
    ctx = jnp.einsum("bhqk,bhkd->bhqd", p, vh).transpose(0, 2, 1, 3)
    ctx = ctx.reshape(B, S, D)
    attn = ctx @ params["wo"] + params["bo"]
    y1 = ln(x + attn, params["g1"], params["be1"])
    h1 = jnp.maximum(y1 @ params["w1"] + params["b1"], 0.0)
    ffn = h1 @ params["w2"] + params["b2"]
    return ln(y1 + ffn, params["g2"], params["be2"])


def init_params(key, d_model, d_ff):
    ks = jax.random.split(key, 8)
    scale = 0.02

    def lin(k, fan_in, fan_out):
        return scale * jax.random.normal(k, (fan_in, fan_out), jnp.float32)

    return {
        "wq": lin(ks[0], d_model, d_model), "bq": jnp.zeros((1, d_model), jnp.float32),
        "wk": lin(ks[1], d_model, d_model), "bk": jnp.zeros((1, d_model), jnp.float32),
        "wv": lin(ks[2], d_model, d_model), "bv": jnp.zeros((1, d_model), jnp.float32),
        "wo": lin(ks[3], d_model, d_model), "bo": jnp.zeros((1, d_model), jnp.float32),
        "g1": jnp.ones((1, d_model), jnp.float32),
        "be1": jnp.zeros((1, d_model), jnp.float32),
        "w1": lin(ks[4], d_model, d_ff), "b1": jnp.zeros((1, d_ff), jnp.float32),
        "w2": lin(ks[5], d_ff, d_model), "b2": jnp.zeros((1, d_model), jnp.float32),
        "g2": jnp.ones((1, d_model), jnp.float32),
        "be2": jnp.zeros((1, d_model), jnp.float32),
    }


if __name__ == "__main__":
    # config: head=2, d_key=16 -> d_model = hidn = 32; d_ff = 64; batch=2, seq=8
    HEAD, D_KEY, D_FF = 2, 16, 64
    D_MODEL = HEAD * D_KEY

    key = jax.random.PRNGKey(0)
    kx, kp, kx2 = jax.random.split(key, 3)
    params = init_params(kp, D_MODEL, D_FF)

    # ---- path 1: tile_q == S (single x stream, fused QKV) ----
    B, S = 2, 8
    x = jax.random.normal(kx, (B, S, D_MODEL), jnp.float32)
    out = jax.block_until_ready(encoder_layer(x, params, num_heads=HEAD, d_key=D_KEY))
    ref = encoder_layer_ref(x, params, num_heads=HEAD, d_key=D_KEY)
    assert out.shape == (B, S, D_MODEL)
    assert jnp.all(jnp.isfinite(out))
    err = float(jnp.max(jnp.abs(out - ref)))
    assert err < 2e-2, f"full-path max abs error {err}"

    # ---- path 2: query-tiled (K/V cached in VMEM scratch, reused per tile) ----
    S2 = 16
    x2 = jax.random.normal(kx2, (B, S2, D_MODEL), jnp.float32)
    out2 = jax.block_until_ready(
        encoder_layer(x2, params, num_heads=HEAD, d_key=D_KEY, tile_q=8))
    ref2 = encoder_layer_ref(x2, params, num_heads=HEAD, d_key=D_KEY)
    assert out2.shape == (B, S2, D_MODEL)
    assert jnp.all(jnp.isfinite(out2))
    err2 = float(jnp.max(jnp.abs(out2 - ref2)))
    assert err2 < 2e-2, f"tiled-path max abs error {err2}"

    print("KERNEL_OK")
</pallas_src>

<mosaic_0001>
module attributes {stable_mosaic.version = 11 : i64} {
  func.func @encoder_layer_kernel_full(%arg0: i32, %arg1: memref<1x8x32xf32, #tpu.memory_space<vmem>>, %arg2: memref<32x96xbf16, #tpu.memory_space<vmem>>, %arg3: memref<1x96xf32, #tpu.memory_space<vmem>>, %arg4: memref<32x32xbf16, #tpu.memory_space<vmem>>, %arg5: memref<32x64xbf16, #tpu.memory_space<vmem>>, %arg6: memref<1x64xf32, #tpu.memory_space<vmem>>, %arg7: memref<64x32xbf16, #tpu.memory_space<vmem>>, %arg8: memref<6x32xf32, #tpu.memory_space<vmem>>, %arg9: memref<1x8x32xf32, #tpu.memory_space<vmem>>) attributes {dimension_semantics = [#tpu.dimension_semantics<parallel>], iteration_bounds = array<i64: 2>, scalar_prefetch = 0 : i64, scratch_operands = 0 : i64, tpu.core_type = #tpu.core_type<tc>, window_params = [{transform_indices = @transform_0, window_bounds = array<i64: 1, 8, 32>}, {pipeline_mode = #tpu.pipeline_mode<synchronous>, transform_indices = @transform_1, window_bounds = array<i64: 32, 96>}, {pipeline_mode = #tpu.pipeline_mode<synchronous>, transform_indices = @transform_2, window_bounds = array<i64: 1, 96>}, {pipeline_mode = #tpu.pipeline_mode<synchronous>, transform_indices = @transform_3, window_bounds = array<i64: 32, 32>}, {pipeline_mode = #tpu.pipeline_mode<synchronous>, transform_indices = @transform_4, window_bounds = array<i64: 32, 64>}, {pipeline_mode = #tpu.pipeline_mode<synchronous>, transform_indices = @transform_5, window_bounds = array<i64: 1, 64>}, {pipeline_mode = #tpu.pipeline_mode<synchronous>, transform_indices = @transform_6, window_bounds = array<i64: 64, 32>}, {pipeline_mode = #tpu.pipeline_mode<synchronous>, transform_indices = @transform_7, window_bounds = array<i64: 6, 32>}, {transform_indices = @transform_8, window_bounds = array<i64: 1, 8, 32>}]} {
    %c0 = arith.constant 0 : index
    %c0_0 = arith.constant 0 : index
    %c0_1 = arith.constant 0 : index
    %0 = vector.load %arg1[%c0, %c0_0, %c0_1] : memref<1x8x32xf32, #tpu.memory_space<vmem>>, vector<1x8x32xf32>
    %1 = vector.shape_cast %0 : vector<1x8x32xf32> to vector<8x32xf32>
    %2 = arith.truncf %1 : vector<8x32xf32> to vector<8x32xbf16>
    %c0_2 = arith.constant 0 : index
    %c0_3 = arith.constant 0 : index
    %3 = vector.load %arg2[%c0_2, %c0_3] : memref<32x96xbf16, #tpu.memory_space<vmem>>, vector<32x96xbf16>
    %cst = arith.constant dense<0.000000e+00> : vector<8x96xf32>
    %4 = tpu.matmul %2, %3, %cst {dimension_numbers = #tpu.dot_dimension_numbers<[1], [0], [0], [1], [0, 0, 1, 1], [], []>} : vector<8x32xbf16>, vector<32x96xbf16>, vector<8x96xf32> -> vector<8x96xf32>
    %c0_4 = arith.constant 0 : index
    %c0_5 = arith.constant 0 : index
    %5 = vector.load %arg3[%c0_4, %c0_5] : memref<1x96xf32, #tpu.memory_space<vmem>>, vector<1x96xf32>
    %6 = vector.broadcast %5 : vector<1x96xf32> to vector<8x96xf32>
    %7 = arith.addf %4, %6 : vector<8x96xf32>
    %8 = vector.extract_strided_slice %7 {offsets = [0, 0], sizes = [8, 32], strides = [1, 1]} : vector<8x96xf32> to vector<8x32xf32>
    %9 = vector.extract_strided_slice %7 {offsets = [0, 32], sizes = [8, 32], strides = [1, 1]} : vector<8x96xf32> to vector<8x32xf32>
    %10 = vector.extract_strided_slice %7 {offsets = [0, 64], sizes = [8, 32], strides = [1, 1]} : vector<8x96xf32> to vector<8x32xf32>
    %c0_6 = arith.constant 0 : index
    %c0_7 = arith.constant 0 : index
    %11 = vector.load %arg8[%c0_6, %c0_7] : memref<6x32xf32, #tpu.memory_space<vmem>>, vector<1x32xf32>
    %c1 = arith.constant 1 : index
    %c0_8 = arith.constant 0 : index
    %12 = vector.load %arg8[%c1, %c0_8] : memref<6x32xf32, #tpu.memory_space<vmem>>, vector<1x32xf32>
    %c2 = arith.constant 2 : index
    %c0_9 = arith.constant 0 : index
    %13 = vector.load %arg8[%c2, %c0_9] : memref<6x32xf32, #tpu.memory_space<vmem>>, vector<1x32xf32>
    %c3 = arith.constant 3 : index
    %c0_10 = arith.constant 0 : index
    %14 = vector.load %arg8[%c3, %c0_10] : memref<6x32xf32, #tpu.memory_space<vmem>>, vector<1x32xf32>
    %c4 = arith.constant 4 : index
    %c0_11 = arith.constant 0 : index
    %15 = vector.load %arg8[%c4, %c0_11] : memref<6x32xf32, #tpu.memory_space<vmem>>, vector<1x32xf32>
    %c5 = arith.constant 5 : index
    %c0_12 = arith.constant 0 : index
    %16 = vector.load %arg8[%c5, %c0_12] : memref<6x32xf32, #tpu.memory_space<vmem>>, vector<1x32xf32>
    %17 = vector.extract_strided_slice %8 {offsets = [0, 0], sizes = [8, 16], strides = [1, 1]} : vector<8x32xf32> to vector<8x16xf32>
    %18 = vector.extract_strided_slice %8 {offsets = [0, 16], sizes = [8, 16], strides = [1, 1]} : vector<8x32xf32> to vector<8x16xf32>
    %19 = vector.shape_cast %17 : vector<8x16xf32> to vector<1x8x16xf32>
    %20 = vector.shape_cast %18 : vector<8x16xf32> to vector<1x8x16xf32>
    %21 = tpu.concatenate %19, %20 in 0 : vector<1x8x16xf32>, vector<1x8x16xf32> -> vector<2x8x16xf32>
    %22 = arith.truncf %21 : vector<2x8x16xf32> to vector<2x8x16xbf16>
    %23 = vector.extract_strided_slice %9 {offsets = [0, 0], sizes = [8, 16], strides = [1, 1]} : vector<8x32xf32> to vector<8x16xf32>
    %24 = vector.extract_strided_slice %9 {offsets = [0, 16], sizes = [8, 16], strides = [1, 1]} : vector<8x32xf32> to vector<8x16xf32>
    %25 = vector.shape_cast %23 : vector<8x16xf32> to vector<1x8x16xf32>
    %26 = vector.shape_cast %24 : vector<8x16xf32> to vector<1x8x16xf32>
    %27 = tpu.concatenate %25, %26 in 0 : vector<1x8x16xf32>, vector<1x8x16xf32> -> vector<2x8x16xf32>
    %28 = arith.truncf %27 : vector<2x8x16xf32> to vector<2x8x16xbf16>
    %29 = vector.extract_strided_slice %10 {offsets = [0, 0], sizes = [8, 16], strides = [1, 1]} : vector<8x32xf32> to vector<8x16xf32>
    %30 = vector.extract_strided_slice %10 {offsets = [0, 16], sizes = [8, 16], strides = [1, 1]} : vector<8x32xf32> to vector<8x16xf32>
    %31 = vector.shape_cast %29 : vector<8x16xf32> to vector<1x8x16xf32>
    %32 = vector.shape_cast %30 : vector<8x16xf32> to vector<1x8x16xf32>
    %33 = tpu.concatenate %31, %32 in 0 : vector<1x8x16xf32>, vector<1x8x16xf32> -> vector<2x8x16xf32>
    %34 = arith.truncf %33 : vector<2x8x16xf32> to vector<2x8x16xbf16>
    "tpu.trace_start"() <{level = 10 : i32, message = "hqd,hkd->hqk"}> : () -> ()
    %cst_13 = arith.constant dense<0.000000e+00> : vector<2x8x8xf32>
    %35 = tpu.matmul %22, %28, %cst_13 {dimension_numbers = #tpu.dot_dimension_numbers<[2], [2], [1], [1], [0, 0, 0, 1, 1, 1], [0], [0]>} : vector<2x8x16xbf16>, vector<2x8x16xbf16>, vector<2x8x8xf32> -> vector<2x8x8xf32>
    "tpu.trace_stop"() : () -> ()
    %cst_14 = arith.constant dense<0xFF800000> : vector<2x8xf32>
    %36 = vector.multi_reduction <maximumf>, %35, %cst_14 [2] : vector<2x8x8xf32> to vector<2x8xf32>
    %37 = vector.shape_cast %36 : vector<2x8xf32> to vector<2x8x1xf32>
    %38 = vector.broadcast %37 : vector<2x8x1xf32> to vector<2x8x8xf32>
    %39 = arith.subf %35, %38 : vector<2x8x8xf32>
    %40 = math.exp %39 : vector<2x8x8xf32>
    %cst_15 = arith.constant dense<0.000000e+00> : vector<2x8xf32>
    %41 = vector.multi_reduction <add>, %40, %cst_15 [2] : vector<2x8x8xf32> to vector<2x8xf32>
    %42 = vector.shape_cast %41 : vector<2x8xf32> to vector<2x8x1xf32>
    %43 = tpu.reciprocal %42 {approx = true} : vector<2x8x1xf32> -> vector<2x8x1xf32>
    %44 = vector.broadcast %43 : vector<2x8x1xf32> to vector<2x8x8xf32>
    %45 = arith.mulf %40, %44 : vector<2x8x8xf32>
    %46 = arith.truncf %45 : vector<2x8x8xf32> to vector<2x8x8xbf16>
    "tpu.trace_start"() <{level = 10 : i32, message = "hqk,hkd->hqd"}> : () -> ()
    %cst_16 = arith.constant dense<0.000000e+00> : vector<2x8x16xf32>
    %47 = tpu.matmul %46, %34, %cst_16 {dimension_numbers = #tpu.dot_dimension_numbers<[2], [1], [1], [2], [0, 0, 0, 1, 1, 2], [0], [0]>} : vector<2x8x8xbf16>, vector<2x8x16xbf16>, vector<2x8x16xf32> -> vector<2x8x16xf32>
    "tpu.trace_stop"() : () -> ()
    %48 = vector.extract_strided_slice %47 {offsets = [0, 0, 0], sizes = [1, 8, 16], strides = [1, 1, 1]} : vector<2x8x16xf32> to vector<1x8x16xf32>
    %49 = vector.shape_cast %48 : vector<1x8x16xf32> to vector<8x16xf32>
    %50 = vector.extract_strided_slice %47 {offsets = [1, 0, 0], sizes = [1, 8, 16], strides = [1, 1, 1]} : vector<2x8x16xf32> to vector<1x8x16xf32>
    %51 = vector.shape_cast %50 : vector<1x8x16xf32> to vector<8x16xf32>
    %52 = tpu.concatenate %49, %51 in 1 : vector<8x16xf32>, vector<8x16xf32> -> vector<8x32xf32>
    %53 = arith.truncf %52 : vector<8x32xf32> to vector<8x32xbf16>
    %c0_17 = arith.constant 0 : index
    %c0_18 = arith.constant 0 : index
    %54 = vector.load %arg4[%c0_17, %c0_18] : memref<32x32xbf16, #tpu.memory_space<vmem>>, vector<32x32xbf16>
    %cst_19 = arith.constant dense<0.000000e+00> : vector<8x32xf32>
    %55 = tpu.matmul %53, %54, %cst_19 {dimension_numbers = #tpu.dot_dimension_numbers<[1], [0], [0], [1], [0, 0, 1, 1], [], []>} : vector<8x32xbf16>, vector<32x32xbf16>, vector<8x32xf32> -> vector<8x32xf32>
    %56 = vector.broadcast %11 : vector<1x32xf32> to vector<8x32xf32>
    %57 = arith.addf %55, %56 : vector<8x32xf32>
    %58 = arith.addf %1, %57 : vector<8x32xf32>
    %cst_20 = arith.constant dense<0.000000e+00> : vector<8xf32>
    %59 = vector.multi_reduction <add>, %58, %cst_20 [1] : vector<8x32xf32> to vector<8xf32>
    %60 = vector.shape_cast %59 : vector<8xf32> to vector<8x1xf32>
    %cst_21 = arith.constant 3.200000e+01 : f32
    %61 = vector.broadcast %cst_21 : f32 to vector<8x1xf32>
    %62 = arith.divf %60, %61 : vector<8x1xf32>
    %63 = vector.broadcast %62 : vector<8x1xf32> to vector<8x32xf32>
    %64 = arith.subf %58, %63 : vector<8x32xf32>
    %65 = arith.mulf %64, %64 : vector<8x32xf32>
    %cst_22 = arith.constant dense<0.000000e+00> : vector<8xf32>
    %66 = vector.multi_reduction <add>, %65, %cst_22 [1] : vector<8x32xf32> to vector<8xf32>
    %67 = vector.shape_cast %66 : vector<8xf32> to vector<8x1xf32>
    %cst_23 = arith.constant 3.200000e+01 : f32
    %68 = vector.broadcast %cst_23 : f32 to vector<8x1xf32>
    %69 = arith.divf %67, %68 : vector<8x1xf32>
    %cst_24 = arith.constant 9.99999974E-6 : f32
    %70 = vector.broadcast %cst_24 : f32 to vector<8x1xf32>
    %71 = arith.addf %69, %70 : vector<8x1xf32>
    %72 = math.rsqrt %71 : vector<8x1xf32>
    %73 = vector.broadcast %72 : vector<8x1xf32> to vector<8x32xf32>
    %74 = arith.mulf %64, %73 : vector<8x32xf32>
    %75 = vector.broadcast %12 : vector<1x32xf32> to vector<8x32xf32>
    %76 = arith.mulf %74, %75 : vector<8x32xf32>
    %77 = vector.broadcast %13 : vector<1x32xf32> to vector<8x32xf32>
    %78 = arith.addf %76, %77 : vector<8x32xf32>
    %79 = arith.truncf %78 : vector<8x32xf32> to vector<8x32xbf16>
    %c0_25 = arith.constant 0 : index
    %c0_26 = arith.constant 0 : index
    %80 = vector.load %arg5[%c0_25, %c0_26] : memref<32x64xbf16, #tpu.memory_space<vmem>>, vector<32x64xbf16>
    %cst_27 = arith.constant dense<0.000000e+00> : vector<8x64xf32>
    %81 = tpu.matmul %79, %80, %cst_27 {dimension_numbers = #tpu.dot_dimension_numbers<[1], [0], [0], [1], [0, 0, 1, 1], [], []>} : vector<8x32xbf16>, vector<32x64xbf16>, vector<8x64xf32> -> vector<8x64xf32>
    %c0_28 = arith.constant 0 : index
    %c0_29 = arith.constant 0 : index
    %82 = vector.load %arg6[%c0_28, %c0_29] : memref<1x64xf32, #tpu.memory_space<vmem>>, vector<1x64xf32>
    %83 = vector.broadcast %82 : vector<1x64xf32> to vector<8x64xf32>
    %84 = arith.addf %81, %83 : vector<8x64xf32>
    %cst_30 = arith.constant 0.000000e+00 : f32
    %85 = vector.broadcast %cst_30 : f32 to vector<8x64xf32>
    %86 = arith.maximumf %84, %85 : vector<8x64xf32>
    %87 = arith.truncf %86 : vector<8x64xf32> to vector<8x64xbf16>
    %c0_31 = arith.constant 0 : index
    %c0_32 = arith.constant 0 : index
    %88 = vector.load %arg7[%c0_31, %c0_32] : memref<64x32xbf16, #tpu.memory_space<vmem>>, vector<64x32xbf16>
    %cst_33 = arith.constant dense<0.000000e+00> : vector<8x32xf32>
    %89 = tpu.matmul %87, %88, %cst_33 {dimension_numbers = #tpu.dot_dimension_numbers<[1], [0], [0], [1], [0, 0, 1, 1], [], []>} : vector<8x64xbf16>, vector<64x32xbf16>, vector<8x32xf32> -> vector<8x32xf32>
    %90 = vector.broadcast %14 : vector<1x32xf32> to vector<8x32xf32>
    %91 = arith.addf %89, %90 : vector<8x32xf32>
    %92 = arith.addf %78, %91 : vector<8x32xf32>
    %cst_34 = arith.constant dense<0.000000e+00> : vector<8xf32>
    %93 = vector.multi_reduction <add>, %92, %cst_34 [1] : vector<8x32xf32> to vector<8xf32>
    %94 = vector.shape_cast %93 : vector<8xf32> to vector<8x1xf32>
    %cst_35 = arith.constant 3.200000e+01 : f32
    %95 = vector.broadcast %cst_35 : f32 to vector<8x1xf32>
    %96 = arith.divf %94, %95 : vector<8x1xf32>
    %97 = vector.broadcast %96 : vector<8x1xf32> to vector<8x32xf32>
    %98 = arith.subf %92, %97 : vector<8x32xf32>
    %99 = arith.mulf %98, %98 : vector<8x32xf32>
    %cst_36 = arith.constant dense<0.000000e+00> : vector<8xf32>
    %100 = vector.multi_reduction <add>, %99, %cst_36 [1] : vector<8x32xf32> to vector<8xf32>
    %101 = vector.shape_cast %100 : vector<8xf32> to vector<8x1xf32>
    %cst_37 = arith.constant 3.200000e+01 : f32
    %102 = vector.broadcast %cst_37 : f32 to vector<8x1xf32>
    %103 = arith.divf %101, %102 : vector<8x1xf32>
    %cst_38 = arith.constant 9.99999974E-6 : f32
    %104 = vector.broadcast %cst_38 : f32 to vector<8x1xf32>
    %105 = arith.addf %103, %104 : vector<8x1xf32>
    %106 = math.rsqrt %105 : vector<8x1xf32>
    %107 = vector.broadcast %106 : vector<8x1xf32> to vector<8x32xf32>
    %108 = arith.mulf %98, %107 : vector<8x32xf32>
    %109 = vector.broadcast %15 : vector<1x32xf32> to vector<8x32xf32>
    %110 = arith.mulf %108, %109 : vector<8x32xf32>
    %111 = vector.broadcast %16 : vector<1x32xf32> to vector<8x32xf32>
    %112 = arith.addf %110, %111 : vector<8x32xf32>
    %c0_39 = arith.constant 0 : index
    %c0_40 = arith.constant 0 : index
    %c0_41 = arith.constant 0 : index
    %113 = vector.load %arg9[%c0_39, %c0_40, %c0_41] : memref<1x8x32xf32, #tpu.memory_space<vmem>>, vector<1x8x32xf32>
    %114 = vector.shape_cast %113 : vector<1x8x32xf32> to vector<8x32xf32>
    %115 = vector.shape_cast %112 : vector<8x32xf32> to vector<1x8x32xf32>
    tpu.vector_store %arg9[%c0_39, %c0_40, %c0_41], %115 {strides = array<i32>} : memref<1x8x32xf32, #tpu.memory_space<vmem>>, vector<1x8x32xf32>,
    return
  }
  func.func @transform_0(%arg0: i32) -> (i32, i32, i32) {
    %c0_i32 = arith.constant 0 : i32
    %c0_i32_0 = arith.constant 0 : i32
    %c0_i32_1 = arith.constant 0 : i32
    return %arg0, %c0_i32, %c0_i32_0 : i32, i32, i32
  }
  func.func @transform_1(%arg0: i32) -> (i32, i32) {
    %c0_i32 = arith.constant 0 : i32
    %c0_i32_0 = arith.constant 0 : i32
    %c0_i32_1 = arith.constant 0 : i32
    return %c0_i32, %c0_i32_0 : i32, i32
  }
  func.func @transform_2(%arg0: i32) -> (i32, i32) {
    %c0_i32 = arith.constant 0 : i32
    %c0_i32_0 = arith.constant 0 : i32
    %c0_i32_1 = arith.constant 0 : i32
    return %c0_i32, %c0_i32_0 : i32, i32
  }
  func.func @transform_3(%arg0: i32) -> (i32, i32) {
    %c0_i32 = arith.constant 0 : i32
    %c0_i32_0 = arith.constant 0 : i32
    %c0_i32_1 = arith.constant 0 : i32
    return %c0_i32, %c0_i32_0 : i32, i32
  }
  func.func @transform_4(%arg0: i32) -> (i32, i32) {
    %c0_i32 = arith.constant 0 : i32
    %c0_i32_0 = arith.constant 0 : i32
    %c0_i32_1 = arith.constant 0 : i32
    return %c0_i32, %c0_i32_0 : i32, i32
  }
  func.func @transform_5(%arg0: i32) -> (i32, i32) {
    %c0_i32 = arith.constant 0 : i32
    %c0_i32_0 = arith.constant 0 : i32
    %c0_i32_1 = arith.constant 0 : i32
    return %c0_i32, %c0_i32_0 : i32, i32
  }
  func.func @transform_6(%arg0: i32) -> (i32, i32) {
    %c0_i32 = arith.constant 0 : i32
    %c0_i32_0 = arith.constant 0 : i32
    %c0_i32_1 = arith.constant 0 : i32
    return %c0_i32, %c0_i32_0 : i32, i32
  }
  func.func @transform_7(%arg0: i32) -> (i32, i32) {
    %c0_i32 = arith.constant 0 : i32
    %c0_i32_0 = arith.constant 0 : i32
    %c0_i32_1 = arith.constant 0 : i32
    return %c0_i32, %c0_i32_0 : i32, i32
  }
  func.func @transform_8(%arg0: i32) -> (i32, i32, i32) {
    %c0_i32 = arith.constant 0 : i32
    %c0_i32_0 = arith.constant 0 : i32
    %c0_i32_1 = arith.constant 0 : i32
    return %arg0, %c0_i32, %c0_i32_0 : i32, i32, i32
  }
}

</mosaic_0001>

<llo_original>
// kernel: tpu_custom_call.1
$region0: #{tpu_custom_call.1}
  #allocation0 [shape = 'u32[]', space=smem, size = 0x4, offset = 0x4, fixed_abs, tag = 'smem constant byte address 0x4 - core index']
  #allocation1 [shape = 'u32[72,128]{1,0:T(1,128)}', space=vmem, size = 0x9000, scoped, tag = 'internal scratch']
  %s0 = inlined_call_operand.vmem [shape: f32[2,8,32], index: 0, kind: input, shape index: {}]
  %s1 = inlined_call_operand.vmem [shape: bf16[32,96], index: 1, kind: input, shape index: {}]
  %s2 = inlined_call_operand.vmem [shape: f32[1,96], index: 2, kind: input, shape index: {}]
  %s3 = inlined_call_operand.vmem [shape: bf16[32,32], index: 3, kind: input, shape index: {}]
  %s4 = inlined_call_operand.hbm [shape: bf16[32,64], index: 4, kind: input, shape index: {}]
  %s5 = inlined_call_operand.vmem [shape: f32[1,64], index: 5, kind: input, shape index: {}]
  %s6 = inlined_call_operand.vmem [shape: bf16[64,32], index: 6, kind: input, shape index: {}]
  %s7 = inlined_call_operand.hbm [shape: f32[6,32], index: 7, kind: input, shape index: {}]
  %s8 = inlined_call_operand.hbm [shape: f32[2,8,32], index: 8, kind: output, shape index: {}]
  %s9 = sld [smem:[#allocation0]]
  $region73: #{tpu_custom_call.1} parent=0
    _
  %s11 = ssub.s32 1, %s9
  %s12 = scalar_select 0, %s11, %s9
  $region1: #{tpu_custom_call.1} parent=0
    #allocation2 [shape = 'u8[8192]{0}', space=vmem, size = 0x2000, scoped, tag = 'input window, operand 4, single buffered']
    #allocation3 [shape = 's32[2]{0}', space=sflag, size = 0x8, scoped, tag = 'scoped memory for tpu_custom_call.1']
    #allocation4 [shape = 's32[2]{0}', space=sflag, size = 0x8, scoped, tag = 'scoped memory for tpu_custom_call.1']
    #allocation5 [shape = 'u8[4096]{0}', space=vmem, size = 0x1000, scoped, tag = 'input window, operand 7, single buffered']
    #allocation6 [shape = 's32[1]{0}', space=sflag, size = 0x4, scoped, tag = 'scoped memory for tpu_custom_call.1']
    #allocation7 [shape = 'u8[8192]{0}', space=vmem, size = 0x2000, scoped, tag = 'output window, operand 0']
    %13 = vsyncpa [#allocation3], 0
    %14 = vsyncpa [#allocation6], 0
    %15 = vsyncpa [#allocation4], 0
    %s16 = scalar_lea.sflag [#allocation4], 1
    %17 = vsyncpa %s16, 0
    loop: start=0, step=1, limit=4
    $region2: #{tpu_custom_call.1} parent=1 // loop_pre_header
      _
    $region3: #{tpu_custom_call.1} parent=1 // loop_header
      %s19 = sphi 0, %s23
      %p20 = scmp.ge.s32.totalorder %s19, 4
      %s29 = sphi 0, %s31
      %s32 = sphi 0, %s29
      %s33 = sphi 0, %s32
      %s49 = sphi 0, %s33
      %s53 = sphi 0, %s53
      %s55 = sphi 0, %s53
      %s56 = sphi 0, %s55
      %s70 = sphi 0, %s56
      %s74 = sphi 0, %s74
      %s76 = sphi 0, %s74
      %s77 = sphi 0, %s76
      %s91 = sphi 0, %s77
      %s95 = sphi 0, %s95
      %s97 = sphi 0, %s95
      %s98 = sphi 0, %s97
      %s112 = sphi 0, %s98
      %s116 = sphi 0, %s116
      %s118 = sphi 0, %s116
      %s119 = sphi 0, %s118
      %s133 = sphi 0, %s119
      %s137 = sphi 0, %s137
      %s139 = sphi 0, %s137
      %s140 = sphi 0, %s139
      %s154 = sphi 0, %s140
      %s158 = sphi 0, %s158
      %s160 = sphi 0, %s158
      %s161 = sphi 0, %s160
      %s175 = sphi 0, %s161
      %s179 = sphi 0, %s179
      %s181 = sphi 0, %s179
      %s182 = sphi 0, %s181
      %s196 = sphi 0, %s182
      %s202 = sphi 0, %s204
      %s205 = sphi 0, %s202
      %s206 = sphi 0, %s205
      %s222 = sphi 0, %s206
    $region4: #{tpu_custom_call.1} parent=1 // loop_header_branch
      %22 = sbr.rel (%p20) target = $region8
    $region5: #{tpu_custom_call.1} parent=1 // loop_body
      %s24 = ssub.s32 %s19, 1
      %s25 = ssub.s32 %s19, 2
      %s26 = sadd.s32 %s19, 1
      %s27 = ssub.s32 %s19, %s26
      %p28 = scmp.eq.s32.totalorder %s27, 0
      %s30 = sadd.s32 %s29, 1
      %s31 = scalar_select %p28, %s29, %s30
      %p34 = pneg %p28
      %p35 = scmp.eq.s32.totalorder %s19, 1
      %p36 = por %p34, %p35
      %p37 = scmp.ne.s32.totalorder %s29, %s32
      %p38 = scmp.eq.s32.totalorder %s19, 0
      %p39 = por %p37, %p38
      %p40 = scmp.ne.s32.totalorder %s29, %s32
      %p41 = scmp.eq.s32.totalorder %s24, 1
      %p42 = por %p40, %p41
      %p43 = scmp.ne.s32.totalorder %s32, %s33
      %p44 = scmp.eq.s32.totalorder %s24, 0
      %p45 = por %p43, %p44
      %p46 = scmp.ne.s32.totalorder %s32, %s33
      %p47 = scmp.eq.s32.totalorder %s25, 1
      %p48 = por %p46, %p47
      %p50 = scmp.ne.s32.totalorder %s33, %s49
      %p51 = scmp.eq.s32.totalorder %s25, 0
      %p52 = por %p50, %p51
      %s54 = sadd.s32 %s53, 1
      %p57 = scmp.eq.s32.totalorder %s19, 1
      %p58 = scmp.ne.s32.totalorder %s53, %s55
      %p59 = scmp.eq.s32.totalorder %s19, 0
      %p60 = por %p58, %p59
      %p61 = scmp.ne.s32.totalorder %s53, %s55
      %p62 = scmp.eq.s32.totalorder %s24, 1
      %p63 = por %p61, %p62
      %p64 = scmp.ne.s32.totalorder %s55, %s56
      %p65 = scmp.eq.s32.totalorder %s24, 0
      %p66 = por %p64, %p65
      %p67 = scmp.ne.s32.totalorder %s55, %s56
      %p68 = scmp.eq.s32.totalorder %s25, 1
      %p69 = por %p67, %p68
      %p71 = scmp.ne.s32.totalorder %s56, %s70
      %p72 = scmp.eq.s32.totalorder %s25, 0
      %p73 = por %p71, %p72
      %s75 = sadd.s32 %s74, 1
      %p78 = scmp.eq.s32.totalorder %s19, 1
      %p79 = scmp.ne.s32.totalorder %s74, %s76
      %p80 = scmp.eq.s32.totalorder %s19, 0
      %p81 = por %p79, %p80
      %p82 = scmp.ne.s32.totalorder %s74, %s76
      %p83 = scmp.eq.s32.totalorder %s24, 1
      %p84 = por %p82, %p83
      %p85 = scmp.ne.s32.totalorder %s76, %s77
      %p86 = scmp.eq.s32.totalorder %s24, 0
      %p87 = por %p85, %p86
      %p88 = scmp.ne.s32.totalorder %s76, %s77
      %p89 = scmp.eq.s32.totalorder %s25, 1
      %p90 = por %p88, %p89
      %p92 = scmp.ne.s32.totalorder %s77, %s91
      %p93 = scmp.eq.s32.totalorder %s25, 0
      %p94 = por %p92, %p93
      %s96 = sadd.s32 %s95, 1
      %p99 = scmp.eq.s32.totalorder %s19, 1
      %p100 = scmp.ne.s32.totalorder %s95, %s97
      %p101 = scmp.eq.s32.totalorder %s19, 0
      %p102 = por %p100, %p101
      %p103 = scmp.ne.s32.totalorder %s95, %s97
      %p104 = scmp.eq.s32.totalorder %s24, 1
      %p105 = por %p103, %p104
      %p106 = scmp.ne.s32.totalorder %s97, %s98
      %p107 = scmp.eq.s32.totalorder %s24, 0
      %p108 = por %p106, %p107
      %p109 = scmp.ne.s32.totalorder %s97, %s98
      %p110 = scmp.eq.s32.totalorder %s25, 1
      %p111 = por %p109, %p110
      %p113 = scmp.ne.s32.totalorder %s98, %s112
      %p114 = scmp.eq.s32.totalorder %s25, 0
      %p115 = por %p113, %p114
      %s117 = sadd.s32 %s116, 1
      %p120 = scmp.eq.s32.totalorder %s19, 1
      %p121 = scmp.ne.s32.totalorder %s116, %s118
      %p122 = scmp.eq.s32.totalorder %s19, 0
      %p123 = por %p121, %p122
      %p124 = scmp.ne.s32.totalorder %s116, %s118
      %p125 = scmp.eq.s32.totalorder %s24, 1
      %p126 = por %p124, %p125
      %p127 = scmp.ne.s32.totalorder %s118, %s119
      %p128 = scmp.eq.s32.totalorder %s24, 0
      %p129 = por %p127, %p128
      %p130 = scmp.ne.s32.totalorder %s118, %s119
      %p131 = scmp.eq.s32.totalorder %s25, 1
      %p132 = por %p130, %p131
      %p134 = scmp.ne.s32.totalorder %s119, %s133
      %p135 = scmp.eq.s32.totalorder %s25, 0
      %p136 = por %p134, %p135
      %s138 = sadd.s32 %s137, 1
      %p141 = scmp.eq.s32.totalorder %s19, 1
      %p142 = scmp.ne.s32.totalorder %s137, %s139
      %p143 = scmp.eq.s32.totalorder %s19, 0
      %p144 = por %p142, %p143
      %p145 = scmp.ne.s32.totalorder %s137, %s139
      %p146 = scmp.eq.s32.totalorder %s24, 1
      %p147 = por %p145, %p146
      %p148 = scmp.ne.s32.totalorder %s139, %s140
      %p149 = scmp.eq.s32.totalorder %s24, 0
      %p150 = por %p148, %p149
      %p151 = scmp.ne.s32.totalorder %s139, %s140
      %p152 = scmp.eq.s32.totalorder %s25, 1
      %p153 = por %p151, %p152
      %p155 = scmp.ne.s32.totalorder %s140, %s154
      %p156 = scmp.eq.s32.totalorder %s25, 0
      %p157 = por %p155, %p156
      %s159 = sadd.s32 %s158, 1
      %p162 = scmp.eq.s32.totalorder %s19, 1
      %p163 = scmp.ne.s32.totalorder %s158, %s160
      %p164 = scmp.eq.s32.totalorder %s19, 0
      %p165 = por %p163, %p164
      %p166 = scmp.ne.s32.totalorder %s158, %s160
      %p167 = scmp.eq.s32.totalorder %s24, 1
      %p168 = por %p166, %p167
      %p169 = scmp.ne.s32.totalorder %s160, %s161
      %p170 = scmp.eq.s32.totalorder %s24, 0
      %p171 = por %p169, %p170
      %p172 = scmp.ne.s32.totalorder %s160, %s161
      %p173 = scmp.eq.s32.totalorder %s25, 1
      %p174 = por %p172, %p173
      %p176 = scmp.ne.s32.totalorder %s161, %s175
      %p177 = scmp.eq.s32.totalorder %s25, 0
      %p178 = por %p176, %p177
      %s180 = sadd.s32 %s179, 1
      %p183 = scmp.eq.s32.totalorder %s19, 1
      %p184 = scmp.ne.s32.totalorder %s179, %s181
      %p185 = scmp.eq.s32.totalorder %s19, 0
      %p186 = por %p184, %p185
      %p187 = scmp.ne.s32.totalorder %s179, %s181
      %p188 = scmp.eq.s32.totalorder %s24, 1
      %p189 = por %p187, %p188
      %p190 = scmp.ne.s32.totalorder %s181, %s182
      %p191 = scmp.eq.s32.totalorder %s24, 0
      %p192 = por %p190, %p191
      %p193 = scmp.ne.s32.totalorder %s181, %s182
      %p194 = scmp.eq.s32.totalorder %s25, 1
      %p195 = por %p193, %p194
      %p197 = scmp.ne.s32.totalorder %s182, %s196
      %p198 = scmp.eq.s32.totalorder %s25, 0
      %p199 = por %p197, %p198
      %s200 = ssub.s32 %s19, %s26
      %p201 = scmp.eq.s32.totalorder %s200, 0
      %s203 = sadd.s32 %s202, 1
      %s204 = scalar_select %p201, %s202, %s203
      %p207 = pneg %p201
      %p208 = scmp.eq.s32.totalorder %s19, 1
      %p209 = por %p207, %p208
      %p210 = scmp.ne.s32.totalorder %s202, %s205
      %p211 = scmp.eq.s32.totalorder %s19, 0
      %p212 = por %p210, %p211
      %p213 = scmp.ne.s32.totalorder %s202, %s205
      %p214 = scmp.eq.s32.totalorder %s24, 1
      %p215 = por %p213, %p214
      %p216 = scmp.ne.s32.totalorder %s205, %s206
      %p217 = scmp.eq.s32.totalorder %s24, 0
      %p218 = por %p216, %p217
      %p219 = scmp.ne.s32.totalorder %s205, %s206
      %p220 = scmp.eq.s32.totalorder %s25, 1
      %p221 = por %p219, %p220
      %p223 = scmp.ne.s32.totalorder %s206, %s222
      %p224 = scmp.eq.s32.totalorder %s25, 0
      %p225 = por %p223, %p224
      %p226 = scmp.le.s32.totalorder 1, %s19
      %p227 = scmp.lt.s32.totalorder %s19, 3
      %p228 = pnand %p226, %p227
      %p229 = pneg %p228
      // Predicated region
      $region9: #{tpu_custom_call.1} parent=5 // pred_check
        _
      $region10: #{tpu_custom_call.1} parent=5 // pred_check_branch
        %231 = sbr.rel (%p228) target = $region12
      $region11: #{tpu_custom_call.1} parent=5 // pred_region
        %s232 = ssub.s32 %s19, 1
        // Predicated region
        $region13: #{tpu_custom_call.1} parent=11 // pred_check
          %p233 = pneg %p66
        $region14: #{tpu_custom_call.1} parent=11 // pred_check_branch
          %235 = sbr.rel (%p233) target = $region16
        $region15: #{tpu_custom_call.1} parent=11 // pred_region
          _
        $region16: #{tpu_custom_call.1} parent=11 // pred_fallthru
          _
        // Predicated region
        $region17: #{tpu_custom_call.1} parent=11 // pred_check
          %p236 = pneg %p87
        $region18: #{tpu_custom_call.1} parent=11 // pred_check_branch
          %238 = sbr.rel (%p236) target = $region20
        $region19: #{tpu_custom_call.1} parent=11 // pred_region
          _
        $region20: #{tpu_custom_call.1} parent=11 // pred_fallthru
          _
        // Predicated region
        $region21: #{tpu_custom_call.1} parent=11 // pred_check
          %p239 = pneg %p108
        $region22: #{tpu_custom_call.1} parent=11 // pred_check_branch
          %241 = sbr.rel (%p239) target = $region24
        $region23: #{tpu_custom_call.1} parent=11 // pred_region
          _
        $region24: #{tpu_custom_call.1} parent=11 // pred_fallthru
          _
        // Predicated region
        $region25: #{tpu_custom_call.1} parent=11 // pred_check
          %p242 = pneg %p129
        $region26: #{tpu_custom_call.1} parent=11 // pred_check_branch
          %244 = sbr.rel (%p242) target = $region28
        $region27: #{tpu_custom_call.1} parent=11 // pred_region
          %246 = vsyncadd [#allocation3], 0
          %s247 = sshll.u32 %s4, 4
          %s248 = int_to_ptr.hbm [resolvable:$true] %s247
          %s249 = sshll.u32 [#allocation2], 4
          %s250 = int_to_ptr.vmem [resolvable:$true] %s249
          %255 = dma.hbm_to_vmem [thread:$0]  %s248, 256, %s250, [#allocation3], 64, 64, 4
        $region28: #{tpu_custom_call.1} parent=11 // pred_fallthru
          _
        // Predicated region
        $region29: #{tpu_custom_call.1} parent=11 // pred_check
          %p256 = pneg %p150
        $region30: #{tpu_custom_call.1} parent=11 // pred_check_branch
          %258 = sbr.rel (%p256) target = $region32
        $region31: #{tpu_custom_call.1} parent=11 // pred_region
          _
        $region32: #{tpu_custom_call.1} parent=11 // pred_fallthru
          _
        // Predicated region
        $region33: #{tpu_custom_call.1} parent=11 // pred_check
          %p259 = pneg %p171
        $region34: #{tpu_custom_call.1} parent=11 // pred_check_branch
          %261 = sbr.rel (%p259) target = $region36
        $region35: #{tpu_custom_call.1} parent=11 // pred_region
          _
        $region36: #{tpu_custom_call.1} parent=11 // pred_fallthru
          _
        // Predicated region
        $region37: #{tpu_custom_call.1} parent=11 // pred_check
          %p262 = pneg %p192
        $region38: #{tpu_custom_call.1} parent=11 // pred_check_branch
          %264 = sbr.rel (%p262) target = $region40
        $region39: #{tpu_custom_call.1} parent=11 // pred_region
          %266 = vsyncadd [#allocation6], 0
          %s268 = sshll.u32 %s7, 4
          %s269 = int_to_ptr.hbm [resolvable:$true] %s268
          %s270 = sshll.u32 [#allocation5], 4
          %s271 = int_to_ptr.vmem [resolvable:$true] %s270
          %273 = dma.hbm_to_vmem [thread:$0]  %s269, 128, %s271, [#allocation6]
        $region40: #{tpu_custom_call.1} parent=11 // pred_fallthru
          _
      $region12: #{tpu_custom_call.1} parent=5 // pred_fallthru
        _
      %p274 = scmp.lt.s32.totalorder %s19, 2
      // Predicated region
      $region41: #{tpu_custom_call.1} parent=5 // pred_check
        %p275 = pneg %p274
      $region42: #{tpu_custom_call.1} parent=5 // pred_check_branch
        %277 = sbr.rel (%p275) target = $region44
      $region43: #{tpu_custom_call.1} parent=5 // pred_region
        // Predicated region
        $region45: #{tpu_custom_call.1} parent=43 // pred_check
          %p278 = pneg %p39
        $region46: #{tpu_custom_call.1} parent=43 // pred_check_branch
          %280 = sbr.rel (%p278) target = $region48
        $region47: #{tpu_custom_call.1} parent=43 // pred_region
          %p281 = scmp.lt.s32.totalorder %s19, 1
          %s282 = scalar_select %p281, %s19, 1
          %s283 = smul.addr %s282, 8
          %s284 = scalar_lea.vmem %s0, %s283
        $region48: #{tpu_custom_call.1} parent=43 // pred_fallthru
          _
      $region44: #{tpu_custom_call.1} parent=5 // pred_fallthru
        _
      %p285 = scmp.le.s32.totalorder 1, %s19
      %p286 = scmp.lt.s32.totalorder %s19, 3
      %p287 = pnand %p285, %p286
      %p288 = pneg %p287
      // Predicated region
      $region49: #{tpu_custom_call.1} parent=5 // pred_check
        _
      $region50: #{tpu_custom_call.1} parent=5 // pred_check_branch
        %290 = sbr.rel (%p287) target = $region52
      $region51: #{tpu_custom_call.1} parent=5 // pred_region
        %s291 = ssub.s32 %s19, 1
        // Predicated region
        $region53: #{tpu_custom_call.1} parent=51 // pred_check
          %p292 = pneg %p129
        $region54: #{tpu_custom_call.1} parent=51 // pred_check_branch
          %294 = sbr.rel (%p292) target = $region56
        $region55: #{tpu_custom_call.1} parent=51 // pred_region
          %296 = dma.done [#allocation3], 256
        $region56: #{tpu_custom_call.1} parent=51 // pred_fallthru
          _
        // Predicated region
        $region57: #{tpu_custom_call.1} parent=51 // pred_check
          %p297 = pneg %p192
        $region58: #{tpu_custom_call.1} parent=51 // pred_check_branch
          %299 = sbr.rel (%p297) target = $region60
        $region59: #{tpu_custom_call.1} parent=51 // pred_region
          %301 = dma.done [#allocation6], 128
        $region60: #{tpu_custom_call.1} parent=51 // pred_fallthru
          _
        %p302 = scmp.lt.s32.totalorder %s24, 1
        %s303 = scalar_select %p302, %s24, 1
        %s304 = smul.addr %s303, 8
        %s305 = scalar_lea.vmem %s0, %s304
        %p306 = pneg %p45
        %p307 = pneg %p42
        %p308 = pneg %p66
        %p309 = pneg %p63
        %p310 = pneg %p87
        %p311 = pneg %p84
        %p312 = pneg %p108
        %p313 = pneg %p105
        %p314 = pneg %p129
        %p315 = pneg %p126
        %p316 = pneg %p150
        %p317 = pneg %p147
        %p318 = pneg %p171
        %p319 = pneg %p168
        %p320 = pneg %p192
        %p321 = pneg %p189
        %p322 = pneg %p218
        %p323 = pneg %p215
        %s324 = sand.u32 %s205, 1
        %s325 = scalar_lea.sflag [#allocation4], %s324
        %s326 = sand.u32 %s205, 1
        %s327 = smul.addr %s326, 8
        %s328 = scalar_lea.vmem [#allocation7], %s327
        %p329 = scmp.lt.s32.totalorder %s24, 1
        %s330 = scalar_select %p329, %s24, 1
        %s331 = smul.addr %s330, 8
        %s332 = scalar_lea.vmem %s0, %s331
        %v334 = vld [vmem:[%s332] sm:$0xff]
        %v335 = vpack.c.bf16 %v334, %v334
        %v336 = vld [vmem:[%s1] sm:$0xf]
        %v337 = vld [vmem:[%s1 + $0x4] sm:$0xf]
        %v338 = vld [vmem:[%s1 + $0x8] sm:$0xf]
        %v339 = vld [vmem:[%s1 + $0xc] sm:$0xf]
        %v340 = vld [vmem:[%s2] sm:$0x1]
        %v342 = vperm.slane %v340, 0
        %v348 = vunpack.c.l.b16 %v336
        %v349 = vunpack.c.l.b16 %v337
        %v350 = vunpack.c.l.b16 %v338
        %v351 = vunpack.c.l.b16 %v339
        %v352 = vpack.c.b16 %v349, %v348
        %v353 = vpack.c.b16 %v351, %v350
        %vm356 = vcmask 261120
        %v358 = vsel %vm356, %v335, 0
        %360 = vmatpush.bf16.msra.mxu0 0
        %361 = vmatpush.bf16.msra.mxu0 0
        %362 = vmatpush.bf16.msra.mxu0 0
        %363 = vmatpush.bf16.msra.mxu0 0
        %364 = vmatpush.bf16.msra.mxu0 0
        %365 = vmatpush.bf16.msra.mxu0 0
        %366 = vmatpush.bf16.msra.mxu0 %v353
        %367 = vmatpush.bf16.msra.mxu0 %v352
        %368 = vmatmul.bf16.gmra.mxu0 %v358
        %v369 = vpop.f32.mrf.mxu0
        %v370 = vadd.f32 %v342, %v369
        %v371 = vpop.f32.mrf.mxu0
        %372 = vdwg.mxu0
        %v373 = vld [vmem:[#allocation5] sm:$0x1]
        %v374 = vld [vmem:[#allocation5 + $0x1] sm:$0x1]
        %v375 = vld [vmem:[#allocation5 + $0x2] sm:$0x1]
        %v376 = vld [vmem:[#allocation5 + $0x3] sm:$0x1]
        %v377 = vld [vmem:[#allocation5 + $0x4] sm:$0x1]
        %v378 = vld [vmem:[#allocation5 + $0x5] sm:$0x1]
        %380 = vrot.lane.b32.xlu0 %v370, 112
        %v381 = vpop.permute.xlu0 %380
        %v383 = vpack.c.bf16 %v370, %v370
        %v384 = vpack.c.bf16 %v381, %v381
        %v386 = vunpack.c.l.b16 %v383
        %v387 = vpack.c.b16 %v386, %v386
        %388 = vrot.lane.b32.xlu0 %v387, 96
        %v389 = vpop.permute.xlu0 %388
        %vm390 = vcmask 130048
        %v392 = vsel %vm390, %v383, 0
        %v395 = vsel %vm390, %v389, 0
        %397 = vmatpush.bf16.xpose.msra.mxu0 0
        %398 = vmatpush.bf16.xpose.msra.mxu0 0
        %399 = vmatpush.bf16.xpose.msra.mxu0 0
        %400 = vmatpush.bf16.xpose.msra.mxu0 0
        %401 = vmatpush.bf16.xpose.msra.mxu0 0
        %402 = vmatpush.bf16.xpose.msra.mxu0 0
        %403 = vmatpush.bf16.xpose.msra.mxu0 0
        %404 = vmatpush.bf16.xpose.msra.mxu0 %v395
        %405 = vmatmul.bf16.gmra.mxu0 %v392
        %v406 = vpop.f32.mrf.mxu0
        %v407 = vadd.f32 0.0, %v406
        %v408 = vpop.f32.mrf.mxu0
        %409 = vdwg.mxu0
        %v411 = vunpack.c.l.b16 %v384
        %v412 = vpack.c.b16 %v411, %v411
        %413 = vrot.lane.b32.xlu0 %v412, 96
        %v414 = vpop.permute.xlu0 %413
        %v416 = vsel %vm390, %v384, 0
        %v419 = vsel %vm390, %v414, 0
        %421 = vmatpush.bf16.xpose.msra.mxu0 0
        %422 = vmatpush.bf16.xpose.msra.mxu0 0
        %423 = vmatpush.bf16.xpose.msra.mxu0 0
        %424 = vmatpush.bf16.xpose.msra.mxu0 0
        %425 = vmatpush.bf16.xpose.msra.mxu0 0
        %426 = vmatpush.bf16.xpose.msra.mxu0 0
        %427 = vmatpush.bf16.xpose.msra.mxu0 0
        %428 = vmatpush.bf16.xpose.msra.mxu0 %v419
        %429 = vmatmul.bf16.gmra.mxu0 %v416
        %v430 = vpop.f32.mrf.mxu0
        %v431 = vadd.f32 0.0, %v430
        %v432 = vpop.f32.mrf.mxu0
        %433 = vdwg.mxu0
        %vm434 = vcmask 64512
        %v435 = vsel %vm434, %v407, -inf
        %436 = vmax.xlane.f32.xlu0 %v435
        %v437 = vpop.xlane.xlu0 %436
        %v438 = vsel %vm434, %v431, -inf
        %439 = vmax.xlane.f32.xlu0 %v438
        %v440 = vpop.xlane.xlu0 %439
        %v441 = vsub.f32 %v407, %v437
        %v442 = vsub.f32 %v431, %v440
        %v443 = vmul.f32 %v441, 1.442695
        %v444 = vpow.pop %v443
        %v445 = vmul.f32 %v442, 1.442695
        %v446 = vpow.pop %v445
        %v447 = vsel %vm434, %v444, 0.0
        %448 = vadd.xlane.f32.xlu0 %v447
        %v449 = vpop.xlane.xlu0 %448
        %v450 = vsel %vm434, %v446, 0.0
        %451 = vadd.xlane.f32.xlu0 %v450
        %v452 = vpop.xlane.xlu0 %451
        %v453 = vrcp.pop %v449
        %v454 = vrcp.pop %v452
        %v455 = vmul.f32 %v444, %v453
        %v456 = vmul.f32 %v446, %v454
        %v457 = vpack.c.bf16 %v455, %v455
        %v458 = vpack.c.bf16 %v456, %v456
        %459 = vrot.lane.b32.xlu0 %v387, 64
        %v460 = vpop.permute.xlu0 %459
        %v462 = vsel %vm434, %v457, 0
        %vm464 = vcmask 1043456
        %v466 = vsel %vm464, %v460, 0
        %468 = vmatpush.bf16.msra.mxu0 0
        %469 = vmatpush.bf16.msra.mxu0 0
        %470 = vmatpush.bf16.msra.mxu0 0
        %471 = vmatpush.bf16.msra.mxu0 0
        %472 = vmatpush.bf16.msra.mxu0 0
        %473 = vmatpush.bf16.msra.mxu0 0
        %474 = vmatpush.bf16.msra.mxu0 0
        %475 = vmatpush.bf16.msra.mxu0 %v466
        %476 = vmatmul.bf16.gmra.mxu0 %v462
        %v477 = vpop.f32.mrf.mxu0
        %v478 = vadd.f32 0.0, %v477
        %v479 = vpop.f32.mrf.mxu0
        %480 = vdwg.mxu0
        %481 = vrot.lane.b32.xlu0 %v412, 64
        %v482 = vpop.permute.xlu0 %481
        %v484 = vsel %vm434, %v458, 0
        %v487 = vsel %vm464, %v482, 0
        %489 = vmatpush.bf16.msra.mxu0 0
        %490 = vmatpush.bf16.msra.mxu0 0
        %491 = vmatpush.bf16.msra.mxu0 0
        %492 = vmatpush.bf16.msra.mxu0 0
        %493 = vmatpush.bf16.msra.mxu0 0
        %494 = vmatpush.bf16.msra.mxu0 0
        %495 = vmatpush.bf16.msra.mxu0 0
        %496 = vmatpush.bf16.msra.mxu0 %v487
        %497 = vmatmul.bf16.gmra.mxu0 %v484
        %v498 = vpop.f32.mrf.mxu0
        %v499 = vadd.f32 0.0, %v498
        %v500 = vpop.f32.mrf.mxu0
        %501 = vdwg.mxu0
        %503 = vrot.lane.b32.xlu0 %v499, 16
        %v504 = vpop.permute.xlu0 %503
        %v506 = vsel %vm390, %v478, %v504
        %v507 = vpack.c.bf16 %v506, %v506
        %v508 = vld [vmem:[%s3] sm:$0xf]
        %v509 = vld [vmem:[%s3 + $0x4] sm:$0xf]
        %v510 = vld [vmem:[%s3 + $0x8] sm:$0xf]
        %v511 = vld [vmem:[%s3 + $0xc] sm:$0xf]
        %v512 = vperm.slane %v373, 0
        %v517 = vunpack.c.l.b16 %v508
        %v518 = vunpack.c.l.b16 %v509
        %v519 = vunpack.c.l.b16 %v510
        %v520 = vunpack.c.l.b16 %v511
        %v521 = vpack.c.b16 %v518, %v517
        %v522 = vpack.c.b16 %v520, %v519
        %v526 = vsel %vm356, %v507, 0
        %528 = vmatpush.bf16.msra.mxu0 0
        %529 = vmatpush.bf16.msra.mxu0 0
        %530 = vmatpush.bf16.msra.mxu0 0
        %531 = vmatpush.bf16.msra.mxu0 0
        %532 = vmatpush.bf16.msra.mxu0 0
        %533 = vmatpush.bf16.msra.mxu0 0
        %534 = vmatpush.bf16.msra.mxu0 %v522
        %535 = vmatpush.bf16.msra.mxu0 %v521
        %536 = vmatmul.bf16.gmra.mxu0 %v526
        %v537 = vpop.f32.mrf.mxu0
        %v538 = vadd.f32 %v512, %v537
        %v539 = vpop.f32.mrf.mxu0
        %540 = vdwg.mxu0
        %v541 = vadd.f32 %v334, %v538
        %v542 = vsel %vm356, %v541, 0.0
        %543 = vadd.xlane.f32.xlu0 %v542
        %v544 = vpop.xlane.xlu0 %543
        %v545 = vrcp.pop 32.0
        %v546 = vmul.f32 32.0, %v545
        %v547 = vsub.f32 1.0, %v546
        %v548 = vmul.f32 %v545, %v547
        %v549 = vadd.f32 %v545, %v548
        %vm550 = vweird.f32 %v545
        %v551 = vsel %vm550, %v545, %v549
        %v552 = vmul.f32 %v544, %v551
        %v553 = vsub.f32 %v541, %v552
        %v554 = vmul.f32 %v553, %v553
        %v555 = vsel %vm356, %v554, 0.0
        %556 = vadd.xlane.f32.xlu0 %v555
        %v557 = vpop.xlane.xlu0 %556
        %v558 = vmul.f32 %v557, %v551
        %v559 = vadd.f32 %v558, 1e-05
        %v560 = vrsqrt.pop %v559
        %v561 = vmul.f32 %v560, %v559
        %v562 = vmul.f32 %v561, %v560
        %v563 = vmul.f32 0.5, %v562
        %v564 = vsub.f32 1.5, %v563
        %v565 = vmul.f32 %v560, %v564
        %vm566 = vweird.f32 %v559
        %vm567 = vweird.f32 %v560
        %vm568 = vmor %vm566, %vm567
        %v569 = vsel %vm568, %v560, %v565
        %v570 = vmul.f32 %v553, %v569
        %v571 = vperm.slane %v374, 0
        %v572 = vmul.f32 %v570, %v571
        %v573 = vperm.slane %v375, 0
        %v574 = vadd.f32 %v572, %v573
        %v575 = vpack.c.bf16 %v574, %v574
        %v576 = vld [vmem:[#allocation2] sm:$0xf]
        %v577 = vld [vmem:[#allocation2 + $0x4] sm:$0xf]
        %v578 = vld [vmem:[#allocation2 + $0x8] sm:$0xf]
        %v579 = vld [vmem:[#allocation2 + $0xc] sm:$0xf]
        %v580 = vld [vmem:[%s5] sm:$0x1]
        %v582 = vperm.slane %v580, 0
        %v588 = vunpack.c.l.b16 %v576
        %v589 = vunpack.c.l.b16 %v577
        %v590 = vunpack.c.l.b16 %v578
        %v591 = vunpack.c.l.b16 %v579
        %v592 = vpack.c.b16 %v589, %v588
        %v593 = vpack.c.b16 %v591, %v590
        %v597 = vsel %vm356, %v575, 0
        %599 = vmatpush.bf16.msra.mxu0 0
        %600 = vmatpush.bf16.msra.mxu0 0
        %601 = vmatpush.bf16.msra.mxu0 0
        %602 = vmatpush.bf16.msra.mxu0 0
        %603 = vmatpush.bf16.msra.mxu0 0
        %604 = vmatpush.bf16.msra.mxu0 0
        %605 = vmatpush.bf16.msra.mxu0 %v593
        %606 = vmatpush.bf16.msra.mxu0 %v592
        %607 = vmatmul.bf16.gmra.mxu0 %v597
        %v608 = vpop.f32.mrf.mxu0
        %v609 = vadd.f32 %v582, %v608
        %v610 = vpop.f32.mrf.mxu0
        %611 = vdwg.mxu0
        %v612 = vmax.f32 %v609, 0.0
        %v613 = vpack.c.bf16 %v612, %v612
        %v614 = vld [vmem:[%s6] sm:$0xf]
        %v615 = vld [vmem:[%s6 + $0x4] sm:$0xf]
        %v616 = vld [vmem:[%s6 + $0x8] sm:$0xf]
        %v617 = vld [vmem:[%s6 + $0xc] sm:$0xf]
        %v618 = vld [vmem:[%s6 + $0x10] sm:$0xf]
        %v619 = vld [vmem:[%s6 + $0x14] sm:$0xf]
        %v620 = vld [vmem:[%s6 + $0x18] sm:$0xf]
        %v621 = vld [vmem:[%s6 + $0x1c] sm:$0xf]
        %v622 = vperm.slane %v376, 0
        %v631 = vunpack.c.l.b16 %v614
        %v632 = vunpack.c.l.b16 %v615
        %v633 = vunpack.c.l.b16 %v616
        %v634 = vunpack.c.l.b16 %v617
        %v635 = vunpack.c.l.b16 %v618
        %v636 = vunpack.c.l.b16 %v619
        %v637 = vunpack.c.l.b16 %v620
        %v638 = vunpack.c.l.b16 %v621
        %v639 = vpack.c.b16 %v632, %v631
        %v640 = vpack.c.b16 %v634, %v633
        %v641 = vpack.c.b16 %v636, %v635
        %v642 = vpack.c.b16 %v638, %v637
        %vm647 = vcmask 523264
        %v649 = vsel %vm647, %v613, 0
        %651 = vmatpush.bf16.msra.mxu0 0
        %652 = vmatpush.bf16.msra.mxu0 0
        %653 = vmatpush.bf16.msra.mxu0 0
        %654 = vmatpush.bf16.msra.mxu0 0
        %655 = vmatpush.bf16.msra.mxu0 %v642
        %656 = vmatpush.bf16.msra.mxu0 %v641
        %657 = vmatpush.bf16.msra.mxu0 %v640
        %658 = vmatpush.bf16.msra.mxu0 %v639
        %659 = vmatmul.bf16.gmra.mxu0 %v649
        %v660 = vpop.f32.mrf.mxu0
        %v661 = vadd.f32 %v622, %v660
        %v662 = vpop.f32.mrf.mxu0
        %663 = vdwg.mxu0
        %v664 = vadd.f32 %v574, %v661
        %v665 = vsel %vm356, %v664, 0.0
        %666 = vadd.xlane.f32.xlu0 %v665
        %v667 = vpop.xlane.xlu0 %666
        %v668 = vmul.f32 %v667, %v551
        %v669 = vsub.f32 %v664, %v668
        %v670 = vmul.f32 %v669, %v669
        %v671 = vsel %vm356, %v670, 0.0
        %672 = vadd.xlane.f32.xlu0 %v671
        %v673 = vpop.xlane.xlu0 %672
        %v674 = vmul.f32 %v673, %v551
        %v675 = vadd.f32 %v674, 1e-05
        %v676 = vrsqrt.pop %v675
        %v677 = vmul.f32 %v676, %v675
        %v678 = vmul.f32 %v677, %v676
        %v679 = vmul.f32 0.5, %v678
        %v680 = vsub.f32 1.5, %v679
        %v681 = vmul.f32 %v676, %v680
        %vm682 = vweird.f32 %v675
        %vm683 = vweird.f32 %v676
        %vm684 = vmor %vm682, %vm683
        %v685 = vsel %vm684, %v676, %v681
        %v686 = vmul.f32 %v669, %v685
        %v687 = vperm.slane %v377, 0
        %v688 = vmul.f32 %v686, %v687
        %v689 = vperm.slane %v378, 0
        %v690 = vadd.f32 %v688, %v689
        %691 = vst.msk [vmem:[%s328] sm:$0xff] %vm356, %v690
        %s692 = sand.u32 %s205, 1
        %s693 = scalar_lea.sflag [#allocation4], %s692
        %s694 = sand.u32 %s205, 1
        %s695 = smul.addr %s694, 8
        %s696 = scalar_lea.vmem [#allocation7], %s695
        // Predicated region
        $region61: #{tpu_custom_call.1} parent=51 // pred_check
          %p697 = pneg %p215
        $region62: #{tpu_custom_call.1} parent=51 // pred_check_branch
          %699 = sbr.rel (%p697) target = $region64
        $region63: #{tpu_custom_call.1} parent=51 // pred_region
          %701 = vsyncadd %s693, 0
          %s702 = smul.addr %s24, 8
          %s703 = scalar_lea.hbm %s8, %s702
          %s705 = sshll.u32 %s696, 4
          %s706 = int_to_ptr.vmem [resolvable:$true] %s705
          %s707 = sshll.u32 %s703, 4
          %s708 = int_to_ptr.hbm [resolvable:$true] %s707
          %710 = dma.vmem_to_hbm [thread:$0]  %s706, 128, %s708, %s693
        $region64: #{tpu_custom_call.1} parent=51 // pred_fallthru
          _
      $region52: #{tpu_custom_call.1} parent=5 // pred_fallthru
        _
      %p711 = scmp.le.s32.totalorder 2, %s19
      // Predicated region
      $region65: #{tpu_custom_call.1} parent=5 // pred_check
        %p712 = pneg %p711
      $region66: #{tpu_custom_call.1} parent=5 // pred_check_branch
        %714 = sbr.rel (%p712) target = $region68
      $region67: #{tpu_custom_call.1} parent=5 // pred_region
        %s715 = ssub.s32 %s19, 2
        // Predicated region
        $region69: #{tpu_custom_call.1} parent=67 // pred_check
          %p716 = pneg %p221
        $region70: #{tpu_custom_call.1} parent=67 // pred_check_branch
          %718 = sbr.rel (%p716) target = $region72
        $region71: #{tpu_custom_call.1} parent=67 // pred_region
          %s719 = sand.u32 %s206, 1
          %s720 = scalar_lea.sflag [#allocation4], %s719
          %s721 = sand.u32 %s206, 1
          %s722 = smul.addr %s721, 8
          %s723 = scalar_lea.vmem [#allocation7], %s722
          %725 = dma.done %s720, 128
        $region72: #{tpu_custom_call.1} parent=67 // pred_fallthru
          _
      $region68: #{tpu_custom_call.1} parent=5 // pred_fallthru
        _
    $region6: #{tpu_custom_call.1} parent=1 // loop_footer
      %s23 = sadd.s32 1, %s19
    $region7: #{tpu_custom_call.1} parent=1 // loop_footer_branch
      %18 = sbr.rel target = $region3
    $region8: #{tpu_custom_call.1} parent=1 // loop_exit
      _
    %726 = vsyncpa [#allocation3], 1
    %s727 = scalar_lea.sflag [#allocation3], 1
    %728 = vsyncpa %s727, 1
    %729 = vsyncpa [#allocation6], 1
    %730 = vsyncpa [#allocation4], 1
    %s731 = scalar_lea.sflag [#allocation4], 1
    %732 = vsyncpa %s731, 1

</llo_original>
